<compile_context>
chip_gen: v7x
topology: tpu7x:2x2x1
jax: 0.10.0
libtpu: 0.0.40
codegen_flags: <defaults>
</compile_context>

<pallas_src>
import functools

import jax
import jax.numpy as jnp
from jax import lax
from jax.experimental import pallas as pl
from jax.experimental.pallas import tpu as pltpu


def _dsconv_kernel(xflat_ref, wd_ref, wpT_ref, bp_ref, out_ref, dw_ref, *, Wp):
    # xflat_ref: (1, Cin, Lpad)   reflect-padded image, spatial flattened (+2 tail pad)
    # wd_ref:    (K, 9, Cin, 1)   depthwise taps, t = dy*3 + dx
    # wpT_ref:   (Cout, K*Cin)    pointwise weights, contraction index k*Cin + c
    # bp_ref:    (Cout, 1)        pointwise bias with depthwise bias folded in
    # out_ref:   (1, Cout, M)     M = H*(W+2): NCHW-flat rows incl. 2 garbage cols/row
    # dw_ref:    (K*Cin, M)       VMEM scratch: fused depthwise result
    Cin = xflat_ref.shape[1]
    K = wd_ref.shape[0]
    M = out_ref.shape[2]

    x = xflat_ref[0]          # (Cin, Lpad)   channels on sublanes, spatial on lanes
    wd = wd_ref[...]          # (K, 9, Cin, 1)

    # The 9 shifted views of the flat padded image (lane-dense, reused for all k).
    taps = []
    for t in range(9):
        off = (t // 3) * Wp + (t % 3)
        taps.append(x[:, off:off + M])          # (Cin, M)

    # Depthwise: shift-and-accumulate on the VPU; first tap initializes (no zeros).
    for k in range(K):
        acc_k = taps[0] * wd[k, 0]              # (Cin, M) * (Cin, 1)
        for t in range(1, 9):
            acc_k = acc_k + taps[t] * wd[k, t]
        dw_ref[k * Cin:(k + 1) * Cin, :] = acc_k    # row k*Cin + c  <->  (c, k)

    # Pointwise: one fused MXU matmul, lane-dense N = M.
    out = jnp.dot(wpT_ref[...], dw_ref[...], preferred_element_type=jnp.float32)
    out_ref[0] = (out + bp_ref[...]).astype(out_ref.dtype)


def dsconv2d_pallas(x_nchw, dw_w, dw_b, pw_w, pw_b):
    """x_nchw: (N, Cin, H, W); params in PyTorch Conv2d layouts."""
    N, Cin, H, W = x_nchw.shape
    CinK = dw_w.shape[0]
    K = CinK // Cin
    Cout = pw_w.shape[0]
    Hp, Wp = H + 2, W + 2
    M = H * Wp                     # per-image output cols incl. 2 discarded per row
    Lpad = Hp * Wp + 2             # +2 tail pad so the (dy=2,dx=2) tap stays in-bounds

    # Reflect pad (padding_mode='reflect'), keep NCHW, flatten spatial.
    xpad = jnp.pad(x_nchw, ((0, 0), (0, 0), (1, 1), (1, 1)), mode="reflect")
    xflat = jnp.pad(xpad.reshape(N, Cin, Hp * Wp), ((0, 0), (0, 0), (0, 2)))

    # Depthwise taps (K, 9, Cin, 1): wd[k, t, c, 0] = dw_w[c*K+k, 0, t//3, t%3].
    wd = jnp.transpose(dw_w[:, 0, :, :].reshape(Cin, K, 9), (1, 2, 0))[..., None]
    # Pointwise weights, transposed and reordered to contraction index k*Cin + c.
    pw2 = pw_w[:, :, 0, 0]                                    # (Cout, Cin*K), idx c*K+k
    wpT = jnp.transpose(pw2.reshape(Cout, Cin, K), (0, 2, 1)).reshape(Cout, K * Cin)
    # Fold depthwise bias into the pointwise bias (exact: the op is linear).
    bp = (pw_b + pw2 @ dw_b)[:, None]                         # (Cout, 1)

    kernel = functools.partial(_dsconv_kernel, Wp=Wp)
    out_wide = pl.pallas_call(
        kernel,
        out_shape=jax.ShapeDtypeStruct((N, Cout, M), x_nchw.dtype),
        grid_spec=pltpu.PrefetchScalarGridSpec(
            num_scalar_prefetch=0,
            grid=(N,),                 # batch axis: shards across the 2 TCs on v7x
            in_specs=[
                pl.BlockSpec((1, Cin, Lpad), lambda n: (n, 0, 0)),
                pl.BlockSpec((K, 9, Cin, 1), lambda n: (0, 0, 0, 0)),
                pl.BlockSpec((Cout, K * Cin), lambda n: (0, 0)),
                pl.BlockSpec((Cout, 1), lambda n: (0, 0)),
            ],
            out_specs=pl.BlockSpec((1, Cout, M), lambda n: (n, 0, 0)),
            scratch_shapes=[pltpu.VMEM((K * Cin, M), jnp.float32)],
        ),
        compiler_params=pltpu.CompilerParams(dimension_semantics=("parallel",)),
    )(xflat, wd, wpT, bp)

    # Drop the 2 wrap/garbage columns per row; output is already NCHW-flat so the
    # reshape is free and no transpose is needed.
    return out_wide.reshape(N, Cout, H, Wp)[:, :, :, :W]


def dsconv2d_ref(x, dw_w, dw_b, pw_w, pw_b):
    """Pure-JAX reference mirroring the PyTorch module (NCHW)."""
    Cin = x.shape[1]
    xpad = jnp.pad(x, ((0, 0), (0, 0), (1, 1), (1, 1)), mode="reflect")
    dw = lax.conv_general_dilated(
        xpad, dw_w, window_strides=(1, 1), padding="VALID",
        dimension_numbers=("NCHW", "OIHW", "NCHW"),
        feature_group_count=Cin)
    dw = dw + dw_b[None, :, None, None]
    out = lax.conv_general_dilated(
        dw, pw_w, window_strides=(1, 1), padding="VALID",
        dimension_numbers=("NCHW", "OIHW", "NCHW"))
    return out + pw_b[None, :, None, None]


if __name__ == "__main__":
    # DSConv2d(nin=4, kernels_per_layer=2, nout=8), input (2, 4, 16, 16)
    N, Cin, H, W = 2, 4, 16, 16
    K, Cout = 2, 8

    key = jax.random.PRNGKey(0)
    kx, k1, k2, k3, k4 = jax.random.split(key, 5)
    x = jax.random.normal(kx, (N, Cin, H, W), dtype=jnp.float32)
    # PyTorch Conv2d parameter shapes (deterministic synthetic init).
    dw_w = 0.1 * jax.random.normal(k1, (Cin * K, 1, 3, 3), dtype=jnp.float32)
    dw_b = 0.1 * jax.random.normal(k2, (Cin * K,), dtype=jnp.float32)
    pw_w = 0.1 * jax.random.normal(k3, (Cout, Cin * K, 1, 1), dtype=jnp.float32)
    pw_b = 0.1 * jax.random.normal(k4, (Cout,), dtype=jnp.float32)

    out = dsconv2d_pallas(x, dw_w, dw_b, pw_w, pw_b)
    jax.block_until_ready(out)

    ref = dsconv2d_ref(x, dw_w, dw_b, pw_w, pw_b)
    assert out.shape == (N, Cout, H, W)
    assert jnp.allclose(out, ref, atol=1e-5, rtol=1e-5), float(jnp.abs(out - ref).max())
    print("KERNEL_OK")
</pallas_src>

<mosaic_0001>
module attributes {stable_mosaic.version = 11 : i64} {
  func.func @_dsconv_kernel(%arg0: i32, %arg1: memref<1x4x326xf32, #tpu.memory_space<vmem>>, %arg2: memref<2x9x4x1xf32, #tpu.memory_space<vmem>>, %arg3: memref<8x8xf32, #tpu.memory_space<vmem>>, %arg4: memref<8x1xf32, #tpu.memory_space<vmem>>, %arg5: memref<1x8x288xf32, #tpu.memory_space<vmem>>, %arg6: memref<8x288xf32, #tpu.memory_space<vmem>>) attributes {dimension_semantics = [#tpu.dimension_semantics<parallel>], iteration_bounds = array<i64: 2>, scalar_prefetch = 0 : i64, scratch_operands = 1 : i64, tpu.core_type = #tpu.core_type<tc>, window_params = [{transform_indices = @transform_0, window_bounds = array<i64: 1, 4, 326>}, {pipeline_mode = #tpu.pipeline_mode<synchronous>, transform_indices = @transform_1, window_bounds = array<i64: 2, 9, 4, 1>}, {pipeline_mode = #tpu.pipeline_mode<synchronous>, transform_indices = @transform_2, window_bounds = array<i64: 8, 8>}, {pipeline_mode = #tpu.pipeline_mode<synchronous>, transform_indices = @transform_3, window_bounds = array<i64: 8, 1>}, {transform_indices = @transform_4, window_bounds = array<i64: 1, 8, 288>}]} {
    %c0 = arith.constant 0 : index
    %c0_0 = arith.constant 0 : index
    %c0_1 = arith.constant 0 : index
    %0 = vector.load %arg1[%c0, %c0_0, %c0_1] : memref<1x4x326xf32, #tpu.memory_space<vmem>>, vector<1x4x326xf32>
    %1 = vector.shape_cast %0 : vector<1x4x326xf32> to vector<4x326xf32>
    %c0_2 = arith.constant 0 : index
    %c0_3 = arith.constant 0 : index
    %c0_4 = arith.constant 0 : index
    %c0_5 = arith.constant 0 : index
    %2 = vector.load %arg2[%c0_2, %c0_3, %c0_4, %c0_5] : memref<2x9x4x1xf32, #tpu.memory_space<vmem>>, vector<2x9x4x1xf32>
    %3 = vector.extract_strided_slice %1 {offsets = [0, 0], sizes = [4, 288], strides = [1, 1]} : vector<4x326xf32> to vector<4x288xf32>
    %4 = vector.extract_strided_slice %1 {offsets = [0, 1], sizes = [4, 288], strides = [1, 1]} : vector<4x326xf32> to vector<4x288xf32>
    %5 = vector.extract_strided_slice %1 {offsets = [0, 2], sizes = [4, 288], strides = [1, 1]} : vector<4x326xf32> to vector<4x288xf32>
    %6 = vector.extract_strided_slice %1 {offsets = [0, 18], sizes = [4, 288], strides = [1, 1]} : vector<4x326xf32> to vector<4x288xf32>
    %7 = vector.extract_strided_slice %1 {offsets = [0, 19], sizes = [4, 288], strides = [1, 1]} : vector<4x326xf32> to vector<4x288xf32>
    %8 = vector.extract_strided_slice %1 {offsets = [0, 20], sizes = [4, 288], strides = [1, 1]} : vector<4x326xf32> to vector<4x288xf32>
    %9 = vector.extract_strided_slice %1 {offsets = [0, 36], sizes = [4, 288], strides = [1, 1]} : vector<4x326xf32> to vector<4x288xf32>
    %10 = vector.extract_strided_slice %1 {offsets = [0, 37], sizes = [4, 288], strides = [1, 1]} : vector<4x326xf32> to vector<4x288xf32>
    %11 = vector.extract_strided_slice %1 {offsets = [0, 38], sizes = [4, 288], strides = [1, 1]} : vector<4x326xf32> to vector<4x288xf32>
    %12 = vector.extract_strided_slice %2 {offsets = [0, 0, 0, 0], sizes = [1, 1, 4, 1], strides = [1, 1, 1, 1]} : vector<2x9x4x1xf32> to vector<1x1x4x1xf32>
    %13 = vector.shape_cast %12 : vector<1x1x4x1xf32> to vector<4x1xf32>
    %14 = vector.broadcast %13 : vector<4x1xf32> to vector<4x288xf32>
    %15 = arith.mulf %3, %14 : vector<4x288xf32>
    %16 = vector.extract_strided_slice %2 {offsets = [0, 1, 0, 0], sizes = [1, 1, 4, 1], strides = [1, 1, 1, 1]} : vector<2x9x4x1xf32> to vector<1x1x4x1xf32>
    %17 = vector.shape_cast %16 : vector<1x1x4x1xf32> to vector<4x1xf32>
    %18 = vector.broadcast %17 : vector<4x1xf32> to vector<4x288xf32>
    %19 = arith.mulf %4, %18 : vector<4x288xf32>
    %20 = arith.addf %15, %19 : vector<4x288xf32>
    %21 = vector.extract_strided_slice %2 {offsets = [0, 2, 0, 0], sizes = [1, 1, 4, 1], strides = [1, 1, 1, 1]} : vector<2x9x4x1xf32> to vector<1x1x4x1xf32>
    %22 = vector.shape_cast %21 : vector<1x1x4x1xf32> to vector<4x1xf32>
    %23 = vector.broadcast %22 : vector<4x1xf32> to vector<4x288xf32>
    %24 = arith.mulf %5, %23 : vector<4x288xf32>
    %25 = arith.addf %20, %24 : vector<4x288xf32>
    %26 = vector.extract_strided_slice %2 {offsets = [0, 3, 0, 0], sizes = [1, 1, 4, 1], strides = [1, 1, 1, 1]} : vector<2x9x4x1xf32> to vector<1x1x4x1xf32>
    %27 = vector.shape_cast %26 : vector<1x1x4x1xf32> to vector<4x1xf32>
    %28 = vector.broadcast %27 : vector<4x1xf32> to vector<4x288xf32>
    %29 = arith.mulf %6, %28 : vector<4x288xf32>
    %30 = arith.addf %25, %29 : vector<4x288xf32>
    %31 = vector.extract_strided_slice %2 {offsets = [0, 4, 0, 0], sizes = [1, 1, 4, 1], strides = [1, 1, 1, 1]} : vector<2x9x4x1xf32> to vector<1x1x4x1xf32>
    %32 = vector.shape_cast %31 : vector<1x1x4x1xf32> to vector<4x1xf32>
    %33 = vector.broadcast %32 : vector<4x1xf32> to vector<4x288xf32>
    %34 = arith.mulf %7, %33 : vector<4x288xf32>
    %35 = arith.addf %30, %34 : vector<4x288xf32>
    %36 = vector.extract_strided_slice %2 {offsets = [0, 5, 0, 0], sizes = [1, 1, 4, 1], strides = [1, 1, 1, 1]} : vector<2x9x4x1xf32> to vector<1x1x4x1xf32>
    %37 = vector.shape_cast %36 : vector<1x1x4x1xf32> to vector<4x1xf32>
    %38 = vector.broadcast %37 : vector<4x1xf32> to vector<4x288xf32>
    %39 = arith.mulf %8, %38 : vector<4x288xf32>
    %40 = arith.addf %35, %39 : vector<4x288xf32>
    %41 = vector.extract_strided_slice %2 {offsets = [0, 6, 0, 0], sizes = [1, 1, 4, 1], strides = [1, 1, 1, 1]} : vector<2x9x4x1xf32> to vector<1x1x4x1xf32>
    %42 = vector.shape_cast %41 : vector<1x1x4x1xf32> to vector<4x1xf32>
    %43 = vector.broadcast %42 : vector<4x1xf32> to vector<4x288xf32>
    %44 = arith.mulf %9, %43 : vector<4x288xf32>
    %45 = arith.addf %40, %44 : vector<4x288xf32>
    %46 = vector.extract_strided_slice %2 {offsets = [0, 7, 0, 0], sizes = [1, 1, 4, 1], strides = [1, 1, 1, 1]} : vector<2x9x4x1xf32> to vector<1x1x4x1xf32>
    %47 = vector.shape_cast %46 : vector<1x1x4x1xf32> to vector<4x1xf32>
    %48 = vector.broadcast %47 : vector<4x1xf32> to vector<4x288xf32>
    %49 = arith.mulf %10, %48 : vector<4x288xf32>
    %50 = arith.addf %45, %49 : vector<4x288xf32>
    %51 = vector.extract_strided_slice %2 {offsets = [0, 8, 0, 0], sizes = [1, 1, 4, 1], strides = [1, 1, 1, 1]} : vector<2x9x4x1xf32> to vector<1x1x4x1xf32>
    %52 = vector.shape_cast %51 : vector<1x1x4x1xf32> to vector<4x1xf32>
    %53 = vector.broadcast %52 : vector<4x1xf32> to vector<4x288xf32>
    %54 = arith.mulf %11, %53 : vector<4x288xf32>
    %55 = arith.addf %50, %54 : vector<4x288xf32>
    %c0_6 = arith.constant 0 : index
    %c0_7 = arith.constant 0 : index
    %56 = vector.load %arg6[%c0_6, %c0_7] : memref<8x288xf32, #tpu.memory_space<vmem>>, vector<4x288xf32>
    tpu.vector_store %arg6[%c0_6, %c0_7], %55 {strides = array<i32>} : memref<8x288xf32, #tpu.memory_space<vmem>>, vector<4x288xf32>,
    %57 = vector.extract_strided_slice %2 {offsets = [1, 0, 0, 0], sizes = [1, 1, 4, 1], strides = [1, 1, 1, 1]} : vector<2x9x4x1xf32> to vector<1x1x4x1xf32>
    %58 = vector.shape_cast %57 : vector<1x1x4x1xf32> to vector<4x1xf32>
    %59 = vector.broadcast %58 : vector<4x1xf32> to vector<4x288xf32>
    %60 = arith.mulf %3, %59 : vector<4x288xf32>
    %61 = vector.extract_strided_slice %2 {offsets = [1, 1, 0, 0], sizes = [1, 1, 4, 1], strides = [1, 1, 1, 1]} : vector<2x9x4x1xf32> to vector<1x1x4x1xf32>
    %62 = vector.shape_cast %61 : vector<1x1x4x1xf32> to vector<4x1xf32>
    %63 = vector.broadcast %62 : vector<4x1xf32> to vector<4x288xf32>
    %64 = arith.mulf %4, %63 : vector<4x288xf32>
    %65 = arith.addf %60, %64 : vector<4x288xf32>
    %66 = vector.extract_strided_slice %2 {offsets = [1, 2, 0, 0], sizes = [1, 1, 4, 1], strides = [1, 1, 1, 1]} : vector<2x9x4x1xf32> to vector<1x1x4x1xf32>
    %67 = vector.shape_cast %66 : vector<1x1x4x1xf32> to vector<4x1xf32>
    %68 = vector.broadcast %67 : vector<4x1xf32> to vector<4x288xf32>
    %69 = arith.mulf %5, %68 : vector<4x288xf32>
    %70 = arith.addf %65, %69 : vector<4x288xf32>
    %71 = vector.extract_strided_slice %2 {offsets = [1, 3, 0, 0], sizes = [1, 1, 4, 1], strides = [1, 1, 1, 1]} : vector<2x9x4x1xf32> to vector<1x1x4x1xf32>
    %72 = vector.shape_cast %71 : vector<1x1x4x1xf32> to vector<4x1xf32>
    %73 = vector.broadcast %72 : vector<4x1xf32> to vector<4x288xf32>
    %74 = arith.mulf %6, %73 : vector<4x288xf32>
    %75 = arith.addf %70, %74 : vector<4x288xf32>
    %76 = vector.extract_strided_slice %2 {offsets = [1, 4, 0, 0], sizes = [1, 1, 4, 1], strides = [1, 1, 1, 1]} : vector<2x9x4x1xf32> to vector<1x1x4x1xf32>
    %77 = vector.shape_cast %76 : vector<1x1x4x1xf32> to vector<4x1xf32>
    %78 = vector.broadcast %77 : vector<4x1xf32> to vector<4x288xf32>
    %79 = arith.mulf %7, %78 : vector<4x288xf32>
    %80 = arith.addf %75, %79 : vector<4x288xf32>
    %81 = vector.extract_strided_slice %2 {offsets = [1, 5, 0, 0], sizes = [1, 1, 4, 1], strides = [1, 1, 1, 1]} : vector<2x9x4x1xf32> to vector<1x1x4x1xf32>
    %82 = vector.shape_cast %81 : vector<1x1x4x1xf32> to vector<4x1xf32>
    %83 = vector.broadcast %82 : vector<4x1xf32> to vector<4x288xf32>
    %84 = arith.mulf %8, %83 : vector<4x288xf32>
    %85 = arith.addf %80, %84 : vector<4x288xf32>
    %86 = vector.extract_strided_slice %2 {offsets = [1, 6, 0, 0], sizes = [1, 1, 4, 1], strides = [1, 1, 1, 1]} : vector<2x9x4x1xf32> to vector<1x1x4x1xf32>
    %87 = vector.shape_cast %86 : vector<1x1x4x1xf32> to vector<4x1xf32>
    %88 = vector.broadcast %87 : vector<4x1xf32> to vector<4x288xf32>
    %89 = arith.mulf %9, %88 : vector<4x288xf32>
    %90 = arith.addf %85, %89 : vector<4x288xf32>
    %91 = vector.extract_strided_slice %2 {offsets = [1, 7, 0, 0], sizes = [1, 1, 4, 1], strides = [1, 1, 1, 1]} : vector<2x9x4x1xf32> to vector<1x1x4x1xf32>
    %92 = vector.shape_cast %91 : vector<1x1x4x1xf32> to vector<4x1xf32>
    %93 = vector.broadcast %92 : vector<4x1xf32> to vector<4x288xf32>
    %94 = arith.mulf %10, %93 : vector<4x288xf32>
    %95 = arith.addf %90, %94 : vector<4x288xf32>
    %96 = vector.extract_strided_slice %2 {offsets = [1, 8, 0, 0], sizes = [1, 1, 4, 1], strides = [1, 1, 1, 1]} : vector<2x9x4x1xf32> to vector<1x1x4x1xf32>
    %97 = vector.shape_cast %96 : vector<1x1x4x1xf32> to vector<4x1xf32>
    %98 = vector.broadcast %97 : vector<4x1xf32> to vector<4x288xf32>
    %99 = arith.mulf %11, %98 : vector<4x288xf32>
    %100 = arith.addf %95, %99 : vector<4x288xf32>
    %c4 = arith.constant 4 : index
    %c0_8 = arith.constant 0 : index
    %101 = vector.load %arg6[%c4, %c0_8] : memref<8x288xf32, #tpu.memory_space<vmem>>, vector<4x288xf32>
    tpu.vector_store %arg6[%c4, %c0_8], %100 {strides = array<i32>} : memref<8x288xf32, #tpu.memory_space<vmem>>, vector<4x288xf32>,
    %c0_9 = arith.constant 0 : index
    %c0_10 = arith.constant 0 : index
    %102 = vector.load %arg3[%c0_9, %c0_10] : memref<8x8xf32, #tpu.memory_space<vmem>>, vector<8x8xf32>
    %c0_11 = arith.constant 0 : index
    %c0_12 = arith.constant 0 : index
    %103 = vector.load %arg6[%c0_11, %c0_12] : memref<8x288xf32, #tpu.memory_space<vmem>>, vector<8x288xf32>
    %cst = arith.constant dense<0.000000e+00> : vector<8x288xf32>
    %104 = tpu.matmul %102, %103, %cst {dimension_numbers = #tpu.dot_dimension_numbers<[1], [0], [0], [1], [0, 0, 1, 1], [], []>} : vector<8x8xf32>, vector<8x288xf32>, vector<8x288xf32> -> vector<8x288xf32>
    %c0_13 = arith.constant 0 : index
    %c0_14 = arith.constant 0 : index
    %105 = vector.load %arg4[%c0_13, %c0_14] : memref<8x1xf32, #tpu.memory_space<vmem>>, vector<8x1xf32>
    %106 = vector.broadcast %105 : vector<8x1xf32> to vector<8x288xf32>
    %107 = arith.addf %104, %106 : vector<8x288xf32>
    %c0_15 = arith.constant 0 : index
    %c0_16 = arith.constant 0 : index
    %c0_17 = arith.constant 0 : index
    %108 = vector.load %arg5[%c0_15, %c0_16, %c0_17] : memref<1x8x288xf32, #tpu.memory_space<vmem>>, vector<1x8x288xf32>
    %109 = vector.shape_cast %108 : vector<1x8x288xf32> to vector<8x288xf32>
    %110 = vector.shape_cast %107 : vector<8x288xf32> to vector<1x8x288xf32>
    tpu.vector_store %arg5[%c0_15, %c0_16, %c0_17], %110 {strides = array<i32>} : memref<1x8x288xf32, #tpu.memory_space<vmem>>, vector<1x8x288xf32>,
    return
  }
  func.func @transform_0(%arg0: i32) -> (i32, i32, i32) {
    %c0_i32 = arith.constant 0 : i32
    %c0_i32_0 = arith.constant 0 : i32
    %c0_i32_1 = arith.constant 0 : i32
    return %arg0, %c0_i32, %c0_i32_0 : i32, i32, i32
  }
  func.func @transform_1(%arg0: i32) -> (i32, i32, i32, i32) {
    %c0_i32 = arith.constant 0 : i32
    %c0_i32_0 = arith.constant 0 : i32
    %c0_i32_1 = arith.constant 0 : i32
    %c0_i32_2 = arith.constant 0 : i32
    %c0_i32_3 = arith.constant 0 : i32
    return %c0_i32, %c0_i32_0, %c0_i32_1, %c0_i32_2 : i32, i32, i32, i32
  }
  func.func @transform_2(%arg0: i32) -> (i32, i32) {
    %c0_i32 = arith.constant 0 : i32
    %c0_i32_0 = arith.constant 0 : i32
    %c0_i32_1 = arith.constant 0 : i32
    return %c0_i32, %c0_i32_0 : i32, i32
  }
  func.func @transform_3(%arg0: i32) -> (i32, i32) {
    %c0_i32 = arith.constant 0 : i32
    %c0_i32_0 = arith.constant 0 : i32
    %c0_i32_1 = arith.constant 0 : i32
    return %c0_i32, %c0_i32_0 : i32, i32
  }
  func.func @transform_4(%arg0: i32) -> (i32, i32, i32) {
    %c0_i32 = arith.constant 0 : i32
    %c0_i32_0 = arith.constant 0 : i32
    %c0_i32_1 = arith.constant 0 : i32
    return %arg0, %c0_i32, %c0_i32_0 : i32, i32, i32
  }
}

</mosaic_0001>

<llo_original>
// kernel: tpu_custom_call.1
$region0: #{tpu_custom_call.1}
  #allocation0 [shape = 'u32[]', space=smem, size = 0x4, offset = 0x4, fixed_abs, tag = 'smem constant byte address 0x4 - core index']
  #allocation1 [shape = 'u32[144,128]{1,0:T(1,128)}', space=vmem, size = 0x12000, scoped, tag = 'internal scratch']
  #allocation2 [shape = 'f32[8,288]{1,0:T(8,128)}', space=vmem, size = 0x3000, scoped, tag = 'scratch operand']
  %s0 = inlined_call_operand.vmem [shape: f32[2,4,326], index: 0, kind: input, shape index: {}]
  %s1 = inlined_call_operand.vmem [shape: f32[2,9,4,1], index: 1, kind: input, shape index: {}]
  %s2 = inlined_call_operand.vmem [shape: f32[8,8], index: 2, kind: input, shape index: {}]
  %s3 = inlined_call_operand.vmem [shape: f32[8,1], index: 3, kind: input, shape index: {}]
  %s4 = inlined_call_operand.hbm [shape: f32[2,8,288], index: 4, kind: output, shape index: {}]
  %s5 = sld [smem:[#allocation0]]
  $region49: #{tpu_custom_call.1} parent=0
    _
  %s7 = ssub.s32 1, %s5
  %s8 = scalar_select 0, %s7, %s5
  $region1: #{tpu_custom_call.1} parent=0
    #allocation3 [shape = 'u8[24576]{0}', space=vmem, size = 0x6000, scoped, tag = 'output window, operand 0']
    #allocation4 [shape = 's32[2]{0}', space=sflag, size = 0x8, scoped, tag = 'scoped memory for tpu_custom_call.1']
    %9 = vsyncpa [#allocation4], 0
    %s10 = scalar_lea.sflag [#allocation4], 1
    %11 = vsyncpa %s10, 0
    loop: start=0, step=1, limit=4
    $region2: #{tpu_custom_call.1} parent=1 // loop_pre_header
      _
    $region3: #{tpu_custom_call.1} parent=1 // loop_header
      %s13 = sphi 0, %s17
      %p14 = scmp.ge.s32.totalorder %s13, 4
      %s23 = sphi 0, %s25
      %s26 = sphi 0, %s23
      %s27 = sphi 0, %s26
      %s43 = sphi 0, %s27
      %s47 = sphi 0, %s47
      %s49 = sphi 0, %s47
      %s50 = sphi 0, %s49
      %s64 = sphi 0, %s50
      %s68 = sphi 0, %s68
      %s70 = sphi 0, %s68
      %s71 = sphi 0, %s70
      %s85 = sphi 0, %s71
      %s89 = sphi 0, %s89
      %s91 = sphi 0, %s89
      %s92 = sphi 0, %s91
      %s106 = sphi 0, %s92
      %s112 = sphi 0, %s114
      %s115 = sphi 0, %s112
      %s116 = sphi 0, %s115
      %s132 = sphi 0, %s116
    $region4: #{tpu_custom_call.1} parent=1 // loop_header_branch
      %16 = sbr.rel (%p14) target = $region8
    $region5: #{tpu_custom_call.1} parent=1 // loop_body
      %s18 = ssub.s32 %s13, 1
      %s19 = ssub.s32 %s13, 2
      %s20 = sadd.s32 %s13, 1
      %s21 = ssub.s32 %s13, %s20
      %p22 = scmp.eq.s32.totalorder %s21, 0
      %s24 = sadd.s32 %s23, 1
      %s25 = scalar_select %p22, %s23, %s24
      %p28 = pneg %p22
      %p29 = scmp.eq.s32.totalorder %s13, 1
      %p30 = por %p28, %p29
      %p31 = scmp.ne.s32.totalorder %s23, %s26
      %p32 = scmp.eq.s32.totalorder %s13, 0
      %p33 = por %p31, %p32
      %p34 = scmp.ne.s32.totalorder %s23, %s26
      %p35 = scmp.eq.s32.totalorder %s18, 1
      %p36 = por %p34, %p35
      %p37 = scmp.ne.s32.totalorder %s26, %s27
      %p38 = scmp.eq.s32.totalorder %s18, 0
      %p39 = por %p37, %p38
      %p40 = scmp.ne.s32.totalorder %s26, %s27
      %p41 = scmp.eq.s32.totalorder %s19, 1
      %p42 = por %p40, %p41
      %p44 = scmp.ne.s32.totalorder %s27, %s43
      %p45 = scmp.eq.s32.totalorder %s19, 0
      %p46 = por %p44, %p45
      %s48 = sadd.s32 %s47, 1
      %p51 = scmp.eq.s32.totalorder %s13, 1
      %p52 = scmp.ne.s32.totalorder %s47, %s49
      %p53 = scmp.eq.s32.totalorder %s13, 0
      %p54 = por %p52, %p53
      %p55 = scmp.ne.s32.totalorder %s47, %s49
      %p56 = scmp.eq.s32.totalorder %s18, 1
      %p57 = por %p55, %p56
      %p58 = scmp.ne.s32.totalorder %s49, %s50
      %p59 = scmp.eq.s32.totalorder %s18, 0
      %p60 = por %p58, %p59
      %p61 = scmp.ne.s32.totalorder %s49, %s50
      %p62 = scmp.eq.s32.totalorder %s19, 1
      %p63 = por %p61, %p62
      %p65 = scmp.ne.s32.totalorder %s50, %s64
      %p66 = scmp.eq.s32.totalorder %s19, 0
      %p67 = por %p65, %p66
      %s69 = sadd.s32 %s68, 1
      %p72 = scmp.eq.s32.totalorder %s13, 1
      %p73 = scmp.ne.s32.totalorder %s68, %s70
      %p74 = scmp.eq.s32.totalorder %s13, 0
      %p75 = por %p73, %p74
      %p76 = scmp.ne.s32.totalorder %s68, %s70
      %p77 = scmp.eq.s32.totalorder %s18, 1
      %p78 = por %p76, %p77
      %p79 = scmp.ne.s32.totalorder %s70, %s71
      %p80 = scmp.eq.s32.totalorder %s18, 0
      %p81 = por %p79, %p80
      %p82 = scmp.ne.s32.totalorder %s70, %s71
      %p83 = scmp.eq.s32.totalorder %s19, 1
      %p84 = por %p82, %p83
      %p86 = scmp.ne.s32.totalorder %s71, %s85
      %p87 = scmp.eq.s32.totalorder %s19, 0
      %p88 = por %p86, %p87
      %s90 = sadd.s32 %s89, 1
      %p93 = scmp.eq.s32.totalorder %s13, 1
      %p94 = scmp.ne.s32.totalorder %s89, %s91
      %p95 = scmp.eq.s32.totalorder %s13, 0
      %p96 = por %p94, %p95
      %p97 = scmp.ne.s32.totalorder %s89, %s91
      %p98 = scmp.eq.s32.totalorder %s18, 1
      %p99 = por %p97, %p98
      %p100 = scmp.ne.s32.totalorder %s91, %s92
      %p101 = scmp.eq.s32.totalorder %s18, 0
      %p102 = por %p100, %p101
      %p103 = scmp.ne.s32.totalorder %s91, %s92
      %p104 = scmp.eq.s32.totalorder %s19, 1
      %p105 = por %p103, %p104
      %p107 = scmp.ne.s32.totalorder %s92, %s106
      %p108 = scmp.eq.s32.totalorder %s19, 0
      %p109 = por %p107, %p108
      %s110 = ssub.s32 %s13, %s20
      %p111 = scmp.eq.s32.totalorder %s110, 0
      %s113 = sadd.s32 %s112, 1
      %s114 = scalar_select %p111, %s112, %s113
      %p117 = pneg %p111
      %p118 = scmp.eq.s32.totalorder %s13, 1
      %p119 = por %p117, %p118
      %p120 = scmp.ne.s32.totalorder %s112, %s115
      %p121 = scmp.eq.s32.totalorder %s13, 0
      %p122 = por %p120, %p121
      %p123 = scmp.ne.s32.totalorder %s112, %s115
      %p124 = scmp.eq.s32.totalorder %s18, 1
      %p125 = por %p123, %p124
      %p126 = scmp.ne.s32.totalorder %s115, %s116
      %p127 = scmp.eq.s32.totalorder %s18, 0
      %p128 = por %p126, %p127
      %p129 = scmp.ne.s32.totalorder %s115, %s116
      %p130 = scmp.eq.s32.totalorder %s19, 1
      %p131 = por %p129, %p130
      %p133 = scmp.ne.s32.totalorder %s116, %s132
      %p134 = scmp.eq.s32.totalorder %s19, 0
      %p135 = por %p133, %p134
      %p136 = scmp.le.s32.totalorder 1, %s13
      %p137 = scmp.lt.s32.totalorder %s13, 3
      %p138 = pnand %p136, %p137
      %p139 = pneg %p138
      // Predicated region
      $region9: #{tpu_custom_call.1} parent=5 // pred_check
        _
      $region10: #{tpu_custom_call.1} parent=5 // pred_check_branch
        %141 = sbr.rel (%p138) target = $region12
      $region11: #{tpu_custom_call.1} parent=5 // pred_region
        %s142 = ssub.s32 %s13, 1
        // Predicated region
        $region13: #{tpu_custom_call.1} parent=11 // pred_check
          %p143 = pneg %p60
        $region14: #{tpu_custom_call.1} parent=11 // pred_check_branch
          %145 = sbr.rel (%p143) target = $region16
        $region15: #{tpu_custom_call.1} parent=11 // pred_region
          _
        $region16: #{tpu_custom_call.1} parent=11 // pred_fallthru
          _
        // Predicated region
        $region17: #{tpu_custom_call.1} parent=11 // pred_check
          %p146 = pneg %p81
        $region18: #{tpu_custom_call.1} parent=11 // pred_check_branch
          %148 = sbr.rel (%p146) target = $region20
        $region19: #{tpu_custom_call.1} parent=11 // pred_region
          _
        $region20: #{tpu_custom_call.1} parent=11 // pred_fallthru
          _
        // Predicated region
        $region21: #{tpu_custom_call.1} parent=11 // pred_check
          %p149 = pneg %p102
        $region22: #{tpu_custom_call.1} parent=11 // pred_check_branch
          %151 = sbr.rel (%p149) target = $region24
        $region23: #{tpu_custom_call.1} parent=11 // pred_region
          _
        $region24: #{tpu_custom_call.1} parent=11 // pred_fallthru
          _
      $region12: #{tpu_custom_call.1} parent=5 // pred_fallthru
        _
      %p152 = scmp.lt.s32.totalorder %s13, 2
      // Predicated region
      $region25: #{tpu_custom_call.1} parent=5 // pred_check
        %p153 = pneg %p152
      $region26: #{tpu_custom_call.1} parent=5 // pred_check_branch
        %155 = sbr.rel (%p153) target = $region28
      $region27: #{tpu_custom_call.1} parent=5 // pred_region
        // Predicated region
        $region29: #{tpu_custom_call.1} parent=27 // pred_check
          %p156 = pneg %p33
        $region30: #{tpu_custom_call.1} parent=27 // pred_check_branch
          %158 = sbr.rel (%p156) target = $region32
        $region31: #{tpu_custom_call.1} parent=27 // pred_region
          %p159 = scmp.lt.s32.totalorder %s13, 1
          %s160 = scalar_select %p159, %s13, 1
          %s161 = smul.addr %s160, 3
          %s162 = smul.addr %s161, 4
          %s163 = scalar_lea.vmem %s0, %s162
        $region32: #{tpu_custom_call.1} parent=27 // pred_fallthru
          _
      $region28: #{tpu_custom_call.1} parent=5 // pred_fallthru
        _
      %p164 = scmp.le.s32.totalorder 1, %s13
      %p165 = scmp.lt.s32.totalorder %s13, 3
      %p166 = pnand %p164, %p165
      %p167 = pneg %p166
      // Predicated region
      $region33: #{tpu_custom_call.1} parent=5 // pred_check
        _
      $region34: #{tpu_custom_call.1} parent=5 // pred_check_branch
        %169 = sbr.rel (%p166) target = $region36
      $region35: #{tpu_custom_call.1} parent=5 // pred_region
        %s170 = ssub.s32 %s13, 1
        %p171 = scmp.lt.s32.totalorder %s18, 1
        %s172 = scalar_select %p171, %s18, 1
        %s173 = smul.addr %s172, 3
        %s174 = smul.addr %s173, 4
        %s175 = scalar_lea.vmem %s0, %s174
        %p176 = pneg %p39
        %p177 = pneg %p36
        %p178 = pneg %p60
        %p179 = pneg %p57
        %p180 = pneg %p81
        %p181 = pneg %p78
        %p182 = pneg %p102
        %p183 = pneg %p99
        %p184 = pneg %p128
        %p185 = pneg %p125
        %s186 = sand.u32 %s115, 1
        %s187 = scalar_lea.sflag [#allocation4], %s186
        %s188 = sand.u32 %s115, 1
        %s189 = smul.addr %s188, 24
        %s190 = scalar_lea.vmem [#allocation3], %s189
        %p191 = scmp.lt.s32.totalorder %s18, 1
        %s192 = scalar_select %p191, %s18, 1
        %s193 = smul.addr %s192, 3
        %s194 = smul.addr %s193, 4
        %s195 = scalar_lea.vmem %s0, %s194
        %v196 = vld [vmem:[%s195] sm:$0xff]
        %v197 = vld [vmem:[%s195 + $0x8] sm:$0xf]
        %v198 = vld [vmem:[%s1] sm:$0xf]
        %v199 = vld [vmem:[%s1 + $0x4] sm:$0xf]
        %v200 = vld [vmem:[%s1 + $0x8] sm:$0xf]
        %v201 = vld [vmem:[%s1 + $0xc] sm:$0xf]
        %v202 = vld [vmem:[%s1 + $0x10] sm:$0xf]
        %v203 = vld [vmem:[%s1 + $0x14] sm:$0xf]
        %v204 = vld [vmem:[%s1 + $0x18] sm:$0xf]
        %v205 = vld [vmem:[%s1 + $0x1c] sm:$0xf]
        %v206 = vld [vmem:[%s1 + $0x20] sm:$0xf]
        %v207 = vld [vmem:[%s1 + $0x24] sm:$0xf]
        %v208 = vld [vmem:[%s1 + $0x28] sm:$0xf]
        %v209 = vld [vmem:[%s1 + $0x2c] sm:$0xf]
        %v210 = vld [vmem:[%s1 + $0x30] sm:$0xf]
        %v211 = vld [vmem:[%s1 + $0x34] sm:$0xf]
        %v212 = vld [vmem:[%s1 + $0x38] sm:$0xf]
        %v213 = vld [vmem:[%s1 + $0x3c] sm:$0xf]
        %v214 = vld [vmem:[%s1 + $0x40] sm:$0xf]
        %v215 = vld [vmem:[%s1 + $0x44] sm:$0xf]
        %217 = vset.pattern.permute.xlu0 0
        %218 = vperm.xlu0 %217, %v198
        %v219 = vpop.permute.xlu0 %218
        %v221 = vunpack.c.l.s4 839922192
        %v222 = vunpack.c.0.s8 %v221
        %v223 = vlaneseq
        %v224 = vshrl.u32 %v223, 7
        %v225 = vsub.s32 %v222, %v224
        %v226 = vrot.slane %v219, %v225
        %v228 = vmul.f32 %v196, %v226
        %v229 = vmul.f32 %v197, %v226
        %231 = vset.pattern.permute.xlu0 0
        %232 = vperm.xlu0 %231, %v199
        %v233 = vpop.permute.xlu0 %232
        %v235 = vunpack.c.l.s4 839922192
        %v236 = vunpack.c.0.s8 %v235
        %v237 = vlaneseq
        %v238 = vshrl.u32 %v237, 7
        %v239 = vsub.s32 %v236, %v238
        %v240 = vrot.slane %v233, %v239
        %v242 = vmul.f32 %v196, %v240
        %v243 = vmul.f32 %v197, %v240
        %246 = vrot.lane.b32.xlu0 %v242, 127
        %v247 = vpop.permute.xlu0 %246
        %248 = vrot.lane.b32.xlu0 %v243, 127
        %v249 = vpop.permute.xlu0 %248
        %v250 = vrot.slane %v247, 4
        %v251 = vrot.slane %v249, 4
        %vm252 = vcmask 1043456
        %v253 = vsel %vm252, %v250, %v251
        %vm254 = vcmask 1039360
        %v255 = vsel %vm254, %v247, %v253
        %v258 = vadd.f32 %v228, %v255
        %v259 = vadd.f32 %v229, %v249
        %261 = vset.pattern.permute.xlu0 0
        %262 = vperm.xlu0 %261, %v200
        %v263 = vpop.permute.xlu0 %262
        %v265 = vunpack.c.l.s4 839922192
        %v266 = vunpack.c.0.s8 %v265
        %v267 = vlaneseq
        %v268 = vshrl.u32 %v267, 7
        %v269 = vsub.s32 %v266, %v268
        %v270 = vrot.slane %v263, %v269
        %v272 = vmul.f32 %v196, %v270
        %v273 = vmul.f32 %v197, %v270
        %276 = vrot.lane.b32.xlu0 %v272, 126
        %v277 = vpop.permute.xlu0 %276
        %278 = vrot.lane.b32.xlu0 %v273, 126
        %v279 = vpop.permute.xlu0 %278
        %v280 = vrot.slane %v277, 4
        %v281 = vrot.slane %v279, 4
        %v282 = vsel %vm252, %v280, %v281
        %vm283 = vcmask 1031168
        %v284 = vsel %vm283, %v277, %v282
        %v287 = vadd.f32 %v258, %v284
        %v288 = vadd.f32 %v259, %v279
        %290 = vset.pattern.permute.xlu0 0
        %291 = vperm.xlu0 %290, %v201
        %v292 = vpop.permute.xlu0 %291
        %v294 = vunpack.c.l.s4 839922192
        %v295 = vunpack.c.0.s8 %v294
        %v296 = vlaneseq
        %v297 = vshrl.u32 %v296, 7
        %v298 = vsub.s32 %v295, %v297
        %v299 = vrot.slane %v292, %v298
        %v301 = vmul.f32 %v196, %v299
        %v302 = vmul.f32 %v197, %v299
        %305 = vrot.lane.b32.xlu0 %v301, 110
        %v306 = vpop.permute.xlu0 %305
        %307 = vrot.lane.b32.xlu0 %v302, 110
        %v308 = vpop.permute.xlu0 %307
        %v309 = vrot.slane %v306, 4
        %v310 = vrot.slane %v308, 4
        %v311 = vsel %vm252, %v309, %v310
        %vm312 = vcmask 900096
        %v313 = vsel %vm312, %v306, %v311
        %v316 = vadd.f32 %v287, %v313
        %v317 = vadd.f32 %v288, %v308
        %319 = vset.pattern.permute.xlu0 0
        %320 = vperm.xlu0 %319, %v202
        %v321 = vpop.permute.xlu0 %320
        %v323 = vunpack.c.l.s4 839922192
        %v324 = vunpack.c.0.s8 %v323
        %v325 = vlaneseq
        %v326 = vshrl.u32 %v325, 7
        %v327 = vsub.s32 %v324, %v326
        %v328 = vrot.slane %v321, %v327
        %v330 = vmul.f32 %v196, %v328
        %v331 = vmul.f32 %v197, %v328
        %334 = vrot.lane.b32.xlu0 %v330, 109
        %v335 = vpop.permute.xlu0 %334
        %336 = vrot.lane.b32.xlu0 %v331, 109
        %v337 = vpop.permute.xlu0 %336
        %v338 = vrot.slane %v335, 4
        %v339 = vrot.slane %v337, 4
        %v340 = vsel %vm252, %v338, %v339
        %vm341 = vcmask 891904
        %v342 = vsel %vm341, %v335, %v340
        %v345 = vadd.f32 %v316, %v342
        %v346 = vadd.f32 %v317, %v337
        %348 = vset.pattern.permute.xlu0 0
        %349 = vperm.xlu0 %348, %v203
        %v350 = vpop.permute.xlu0 %349
        %v352 = vunpack.c.l.s4 839922192
        %v353 = vunpack.c.0.s8 %v352
        %v354 = vlaneseq
        %v355 = vshrl.u32 %v354, 7
        %v356 = vsub.s32 %v353, %v355
        %v357 = vrot.slane %v350, %v356
        %v359 = vmul.f32 %v196, %v357
        %v360 = vmul.f32 %v197, %v357
        %363 = vrot.lane.b32.xlu0 %v359, 108
        %v364 = vpop.permute.xlu0 %363
        %365 = vrot.lane.b32.xlu0 %v360, 108
        %v366 = vpop.permute.xlu0 %365
        %v367 = vrot.slane %v364, 4
        %v368 = vrot.slane %v366, 4
        %v369 = vsel %vm252, %v367, %v368
        %vm370 = vcmask 883712
        %v371 = vsel %vm370, %v364, %v369
        %v374 = vadd.f32 %v345, %v371
        %v375 = vadd.f32 %v346, %v366
        %377 = vset.pattern.permute.xlu0 0
        %378 = vperm.xlu0 %377, %v204
        %v379 = vpop.permute.xlu0 %378
        %v381 = vunpack.c.l.s4 839922192
        %v382 = vunpack.c.0.s8 %v381
        %v383 = vlaneseq
        %v384 = vshrl.u32 %v383, 7
        %v385 = vsub.s32 %v382, %v384
        %v386 = vrot.slane %v379, %v385
        %v388 = vmul.f32 %v196, %v386
        %v389 = vmul.f32 %v197, %v386
        %392 = vrot.lane.b32.xlu0 %v388, 92
        %v393 = vpop.permute.xlu0 %392
        %394 = vrot.lane.b32.xlu0 %v389, 92
        %v395 = vpop.permute.xlu0 %394
        %v396 = vrot.slane %v393, 4
        %v397 = vrot.slane %v395, 4
        %v398 = vsel %vm252, %v396, %v397
        %vm399 = vcmask 752640
        %v400 = vsel %vm399, %v393, %v398
        %v403 = vadd.f32 %v374, %v400
        %v404 = vadd.f32 %v375, %v395
        %406 = vset.pattern.permute.xlu0 0
        %407 = vperm.xlu0 %406, %v205
        %v408 = vpop.permute.xlu0 %407
        %v410 = vunpack.c.l.s4 839922192
        %v411 = vunpack.c.0.s8 %v410
        %v412 = vlaneseq
        %v413 = vshrl.u32 %v412, 7
        %v414 = vsub.s32 %v411, %v413
        %v415 = vrot.slane %v408, %v414
        %v417 = vmul.f32 %v196, %v415
        %v418 = vmul.f32 %v197, %v415
        %421 = vrot.lane.b32.xlu0 %v417, 91
        %v422 = vpop.permute.xlu0 %421
        %423 = vrot.lane.b32.xlu0 %v418, 91
        %v424 = vpop.permute.xlu0 %423
        %v425 = vrot.slane %v422, 4
        %v426 = vrot.slane %v424, 4
        %v427 = vsel %vm252, %v425, %v426
        %vm428 = vcmask 744448
        %v429 = vsel %vm428, %v422, %v427
        %v432 = vadd.f32 %v403, %v429
        %v433 = vadd.f32 %v404, %v424
        %435 = vset.pattern.permute.xlu0 0
        %436 = vperm.xlu0 %435, %v206
        %v437 = vpop.permute.xlu0 %436
        %v439 = vunpack.c.l.s4 839922192
        %v440 = vunpack.c.0.s8 %v439
        %v441 = vlaneseq
        %v442 = vshrl.u32 %v441, 7
        %v443 = vsub.s32 %v440, %v442
        %v444 = vrot.slane %v437, %v443
        %v446 = vmul.f32 %v196, %v444
        %v447 = vmul.f32 %v197, %v444
        %450 = vrot.lane.b32.xlu0 %v446, 90
        %v451 = vpop.permute.xlu0 %450
        %452 = vrot.lane.b32.xlu0 %v447, 90
        %v453 = vpop.permute.xlu0 %452
        %v454 = vrot.slane %v451, 4
        %v455 = vrot.slane %v453, 4
        %v456 = vsel %vm252, %v454, %v455
        %vm457 = vcmask 736256
        %v458 = vsel %vm457, %v451, %v456
        %v461 = vadd.f32 %v432, %v458
        %v462 = vadd.f32 %v433, %v453
        %v464 = vcombine.high %v461, %v461
        %466 = vst [vmem:[#allocation2] sm:$0xf] %v461
        %467 = vst [vmem:[#allocation2 + $0x8] sm:$0xf] %v464
        %vm468 = vcmask 257024
        %469 = vst.msk [vmem:[#allocation2 + $0x10] sm:$0xf] %vm468, %v462
        %471 = vset.pattern.permute.xlu0 0
        %472 = vperm.xlu0 %471, %v207
        %v473 = vpop.permute.xlu0 %472
        %v475 = vunpack.c.l.s4 839922192
        %v476 = vunpack.c.0.s8 %v475
        %v477 = vlaneseq
        %v478 = vshrl.u32 %v477, 7
        %v479 = vsub.s32 %v476, %v478
        %v480 = vrot.slane %v473, %v479
        %v482 = vmul.f32 %v196, %v480
        %v483 = vmul.f32 %v197, %v480
        %485 = vset.pattern.permute.xlu0 0
        %486 = vperm.xlu0 %485, %v208
        %v487 = vpop.permute.xlu0 %486
        %v489 = vunpack.c.l.s4 839922192
        %v490 = vunpack.c.0.s8 %v489
        %v491 = vlaneseq
        %v492 = vshrl.u32 %v491, 7
        %v493 = vsub.s32 %v490, %v492
        %v494 = vrot.slane %v487, %v493
        %v496 = vmul.f32 %v196, %v494
        %v497 = vmul.f32 %v197, %v494
        %500 = vrot.lane.b32.xlu0 %v496, 127
        %v501 = vpop.permute.xlu0 %500
        %502 = vrot.lane.b32.xlu0 %v497, 127
        %v503 = vpop.permute.xlu0 %502
        %v504 = vrot.slane %v501, 4
        %v505 = vrot.slane %v503, 4
        %v506 = vsel %vm252, %v504, %v505
        %v507 = vsel %vm254, %v501, %v506
        %v510 = vadd.f32 %v482, %v507
        %v511 = vadd.f32 %v483, %v503
        %513 = vset.pattern.permute.xlu0 0
        %514 = vperm.xlu0 %513, %v209
        %v515 = vpop.permute.xlu0 %514
        %v517 = vunpack.c.l.s4 839922192
        %v518 = vunpack.c.0.s8 %v517
        %v519 = vlaneseq
        %v520 = vshrl.u32 %v519, 7
        %v521 = vsub.s32 %v518, %v520
        %v522 = vrot.slane %v515, %v521
        %v524 = vmul.f32 %v196, %v522
        %v525 = vmul.f32 %v197, %v522
        %528 = vrot.lane.b32.xlu0 %v524, 126
        %v529 = vpop.permute.xlu0 %528
        %530 = vrot.lane.b32.xlu0 %v525, 126
        %v531 = vpop.permute.xlu0 %530
        %v532 = vrot.slane %v529, 4
        %v533 = vrot.slane %v531, 4
        %v534 = vsel %vm252, %v532, %v533
        %v535 = vsel %vm283, %v529, %v534
        %v538 = vadd.f32 %v510, %v535
        %v539 = vadd.f32 %v511, %v531
        %541 = vset.pattern.permute.xlu0 0
        %542 = vperm.xlu0 %541, %v210
        %v543 = vpop.permute.xlu0 %542
        %v545 = vunpack.c.l.s4 839922192
        %v546 = vunpack.c.0.s8 %v545
        %v547 = vlaneseq
        %v548 = vshrl.u32 %v547, 7
        %v549 = vsub.s32 %v546, %v548
        %v550 = vrot.slane %v543, %v549
        %v552 = vmul.f32 %v196, %v550
        %v553 = vmul.f32 %v197, %v550
        %556 = vrot.lane.b32.xlu0 %v552, 110
        %v557 = vpop.permute.xlu0 %556
        %558 = vrot.lane.b32.xlu0 %v553, 110
        %v559 = vpop.permute.xlu0 %558
        %v560 = vrot.slane %v557, 4
        %v561 = vrot.slane %v559, 4
        %v562 = vsel %vm252, %v560, %v561
        %v563 = vsel %vm312, %v557, %v562
        %v566 = vadd.f32 %v538, %v563
        %v567 = vadd.f32 %v539, %v559
        %569 = vset.pattern.permute.xlu0 0
        %570 = vperm.xlu0 %569, %v211
        %v571 = vpop.permute.xlu0 %570
        %v573 = vunpack.c.l.s4 839922192
        %v574 = vunpack.c.0.s8 %v573
        %v575 = vlaneseq
        %v576 = vshrl.u32 %v575, 7
        %v577 = vsub.s32 %v574, %v576
        %v578 = vrot.slane %v571, %v577
        %v580 = vmul.f32 %v196, %v578
        %v581 = vmul.f32 %v197, %v578
        %584 = vrot.lane.b32.xlu0 %v580, 109
        %v585 = vpop.permute.xlu0 %584
        %586 = vrot.lane.b32.xlu0 %v581, 109
        %v587 = vpop.permute.xlu0 %586
        %v588 = vrot.slane %v585, 4
        %v589 = vrot.slane %v587, 4
        %v590 = vsel %vm252, %v588, %v589
        %v591 = vsel %vm341, %v585, %v590
        %v594 = vadd.f32 %v566, %v591
        %v595 = vadd.f32 %v567, %v587
        %597 = vset.pattern.permute.xlu0 0
        %598 = vperm.xlu0 %597, %v212
        %v599 = vpop.permute.xlu0 %598
        %v601 = vunpack.c.l.s4 839922192
        %v602 = vunpack.c.0.s8 %v601
        %v603 = vlaneseq
        %v604 = vshrl.u32 %v603, 7
        %v605 = vsub.s32 %v602, %v604
        %v606 = vrot.slane %v599, %v605
        %v608 = vmul.f32 %v196, %v606
        %v609 = vmul.f32 %v197, %v606
        %612 = vrot.lane.b32.xlu0 %v608, 108
        %v613 = vpop.permute.xlu0 %612
        %614 = vrot.lane.b32.xlu0 %v609, 108
        %v615 = vpop.permute.xlu0 %614
        %v616 = vrot.slane %v613, 4
        %v617 = vrot.slane %v615, 4
        %v618 = vsel %vm252, %v616, %v617
        %v619 = vsel %vm370, %v613, %v618
        %v622 = vadd.f32 %v594, %v619
        %v623 = vadd.f32 %v595, %v615
        %625 = vset.pattern.permute.xlu0 0
        %626 = vperm.xlu0 %625, %v213
        %v627 = vpop.permute.xlu0 %626
        %v629 = vunpack.c.l.s4 839922192
        %v630 = vunpack.c.0.s8 %v629
        %v631 = vlaneseq
        %v632 = vshrl.u32 %v631, 7
        %v633 = vsub.s32 %v630, %v632
        %v634 = vrot.slane %v627, %v633
        %v636 = vmul.f32 %v196, %v634
        %v637 = vmul.f32 %v197, %v634
        %640 = vrot.lane.b32.xlu0 %v636, 92
        %v641 = vpop.permute.xlu0 %640
        %642 = vrot.lane.b32.xlu0 %v637, 92
        %v643 = vpop.permute.xlu0 %642
        %v644 = vrot.slane %v641, 4
        %v645 = vrot.slane %v643, 4
        %v646 = vsel %vm252, %v644, %v645
        %v647 = vsel %vm399, %v641, %v646
        %v650 = vadd.f32 %v622, %v647
        %v651 = vadd.f32 %v623, %v643
        %653 = vset.pattern.permute.xlu0 0
        %654 = vperm.xlu0 %653, %v214
        %v655 = vpop.permute.xlu0 %654
        %v657 = vunpack.c.l.s4 839922192
        %v658 = vunpack.c.0.s8 %v657
        %v659 = vlaneseq
        %v660 = vshrl.u32 %v659, 7
        %v661 = vsub.s32 %v658, %v660
        %v662 = vrot.slane %v655, %v661
        %v664 = vmul.f32 %v196, %v662
        %v665 = vmul.f32 %v197, %v662
        %668 = vrot.lane.b32.xlu0 %v664, 91
        %v669 = vpop.permute.xlu0 %668
        %670 = vrot.lane.b32.xlu0 %v665, 91
        %v671 = vpop.permute.xlu0 %670
        %v672 = vrot.slane %v669, 4
        %v673 = vrot.slane %v671, 4
        %v674 = vsel %vm252, %v672, %v673
        %v675 = vsel %vm428, %v669, %v674
        %v678 = vadd.f32 %v650, %v675
        %v679 = vadd.f32 %v651, %v671
        %681 = vset.pattern.permute.xlu0 0
        %682 = vperm.xlu0 %681, %v215
        %v683 = vpop.permute.xlu0 %682
        %v685 = vunpack.c.l.s4 839922192
        %v686 = vunpack.c.0.s8 %v685
        %v687 = vlaneseq
        %v688 = vshrl.u32 %v687, 7
        %v689 = vsub.s32 %v686, %v688
        %v690 = vrot.slane %v683, %v689
        %v692 = vmul.f32 %v196, %v690
        %v693 = vmul.f32 %v197, %v690
        %696 = vrot.lane.b32.xlu0 %v692, 90
        %v697 = vpop.permute.xlu0 %696
        %698 = vrot.lane.b32.xlu0 %v693, 90
        %v699 = vpop.permute.xlu0 %698
        %v700 = vrot.slane %v697, 4
        %v701 = vrot.slane %v699, 4
        %v702 = vsel %vm252, %v700, %v701
        %v703 = vsel %vm457, %v697, %v702
        %v706 = vadd.f32 %v678, %v703
        %v707 = vadd.f32 %v679, %v699
        %v710 = vcombine.low %v706, %v706
        %v711 = vcombine.low %v707, %v707
        %714 = vst [vmem:[#allocation2] sm:$0xf0] %v710
        %715 = vst [vmem:[#allocation2 + $0x8] sm:$0xf0] %v706
        %vm716 = vcmask 261124
        %717 = vst.msk [vmem:[#allocation2 + $0x10] sm:$0xf0] %vm716, %v711
        %v718 = vld [vmem:[%s2] sm:$0xff]
        %v719 = vld [vmem:[#allocation2] sm:$0xff]
        %v720 = vld [vmem:[#allocation2 + $0x8] sm:$0xff]
        %v721 = vld [vmem:[#allocation2 + $0x10] sm:$0xff]
        %v722 = vld [vmem:[%s3] sm:$0xff]
        %724 = vset.pattern.permute.xlu0 0
        %725 = vperm.xlu0 %724, %v722
        %v726 = vpop.permute.xlu0 %725
        %vm728 = vcmask 64512
        %v730 = vsel %vm728, %v718, 0
        %732 = vmatprep.subr.mxu0 %v720
        %733 = vmatpush1.msra.mxu0 %v719
        %734 = vmatprep.subr.mxu0 0.0
        %735 = vmatpush1.msra.mxu0 0.0
        %736 = vmatprep.subr.mxu0 0.0
        %737 = vmatpush1.msra.mxu0 0.0
        %738 = vmatprep.subr.mxu0 0.0
        %739 = vmatpush1.msra.mxu0 0.0
        %740 = vmatprep.subr.mxu0 0.0
        %741 = vmatpush1.msra.mxu0 0.0
        %742 = vmatprep.subr.mxu0 0.0
        %743 = vmatpush1.msra.mxu0 0.0
        %744 = vmatprep.subr.mxu0 0.0
        %745 = vmatpush1.msra.mxu0 0.0
        %746 = vmatprep.subr.mxu0 0.0
        %747 = vmatpush1.msra.mxu0 0.0
        %748 = vmatprep.subr.mxu0 0.0
        %749 = vmatpush1.msra.mxu0 0.0
        %750 = vmatprep.subr.mxu0 0.0
        %751 = vmatpush1.msra.mxu0 0.0
        %752 = vmatprep.subr.mxu0 0.0
        %753 = vmatpush1.msra.mxu0 0.0
        %754 = vmatprep.subr.mxu0 0.0
        %755 = vmatpush1.msra.mxu0 0.0
        %756 = vmatprep.subr.mxu0 0.0
        %757 = vmatpush1.msra.mxu0 0.0
        %758 = vmatprep.subr.mxu0 0.0
        %759 = vmatpush1.msra.mxu0 0.0
        %760 = vmatprep.subr.mxu0 0.0
        %761 = vmatpush1.msra.mxu0 0.0
        %762 = vmatprep.subr.mxu0 0.0
        %763 = vmatpush1.msra.mxu0 0.0
        %764 = vmatprep.subr.mxu0 0.0
        %765 = vmatpush1.msra.mxu0 0.0
        %766 = vmatprep.subr.mxu0 0.0
        %767 = vmatpush1.msra.mxu0 0.0
        %768 = vmatprep.subr.mxu0 0.0
        %769 = vmatpush1.msra.mxu0 0.0
        %770 = vmatprep.subr.mxu0 0.0
        %771 = vmatpush1.msra.mxu0 0.0
        %772 = vmatprep.subr.mxu0 0.0
        %773 = vmatpush1.msra.mxu0 0.0
        %774 = vmatprep.subr.mxu0 0.0
        %775 = vmatpush1.msra.mxu0 0.0
        %776 = vmatprep.subr.mxu0 0.0
        %777 = vmatpush1.msra.mxu0 0.0
        %778 = vmatprep.subr.mxu0 0.0
        %779 = vmatpush1.msra.mxu0 0.0
        %780 = vmatprep.subr.mxu0 0.0
        %781 = vmatpush1.msra.mxu0 0.0
        %782 = vmatprep.subr.mxu0 0.0
        %783 = vmatpush1.msra.mxu0 0.0
        %784 = vmatprep.subr.mxu0 0.0
        %785 = vmatpush1.msra.mxu0 0.0
        %786 = vmatprep.subr.mxu0 0.0
        %787 = vmatpush1.msra.mxu0 0.0
        %788 = vmatprep.subr.mxu0 0.0
        %789 = vmatpush1.msra.mxu0 0.0
        %790 = vmatprep.subr.mxu0 0.0
        %791 = vmatpush1.msra.mxu0 0.0
        %792 = vmatprep.subr.mxu0 0.0
        %793 = vmatpush1.msra.mxu0 0.0
        %794 = vmatprep.subr.mxu0 0.0
        %795 = vmatpush1.msra.mxu0 0.0
        %796 = vmatprep.mubr.f32.mxu0 0.0
        %797 = vmatmul.mubr.f32.gmra.mrb[0].mxu0 %v730
        %v798 = vpop.f32.mrb[0].mxu0
        %v799 = vadd.f32 %v726, %v798
        %v800 = vpop.f32.mrb[0].mxu0
        %v801 = vadd.f32 %v726, %v800
        %802 = vdwg.mxu0
        %803 = vmatprep.subr.mxu0 0.0
        %804 = vmatpush1.msra.mxu0 %v721
        %805 = vmatprep.subr.mxu0 0.0
        %806 = vmatpush1.msra.mxu0 0.0
        %807 = vmatprep.subr.mxu0 0.0
        %808 = vmatpush1.msra.mxu0 0.0
        %809 = vmatprep.subr.mxu0 0.0
        %810 = vmatpush1.msra.mxu0 0.0
        %811 = vmatprep.subr.mxu0 0.0
        %812 = vmatpush1.msra.mxu0 0.0
        %813 = vmatprep.subr.mxu0 0.0
        %814 = vmatpush1.msra.mxu0 0.0
        %815 = vmatprep.subr.mxu0 0.0
        %816 = vmatpush1.msra.mxu0 0.0
        %817 = vmatprep.subr.mxu0 0.0
        %818 = vmatpush1.msra.mxu0 0.0
        %819 = vmatprep.subr.mxu0 0.0
        %820 = vmatpush1.msra.mxu0 0.0
        %821 = vmatprep.subr.mxu0 0.0
        %822 = vmatpush1.msra.mxu0 0.0
        %823 = vmatprep.subr.mxu0 0.0
        %824 = vmatpush1.msra.mxu0 0.0
        %825 = vmatprep.subr.mxu0 0.0
        %826 = vmatpush1.msra.mxu0 0.0
        %827 = vmatprep.subr.mxu0 0.0
        %828 = vmatpush1.msra.mxu0 0.0
        %829 = vmatprep.subr.mxu0 0.0
        %830 = vmatpush1.msra.mxu0 0.0
        %831 = vmatprep.subr.mxu0 0.0
        %832 = vmatpush1.msra.mxu0 0.0
        %833 = vmatprep.subr.mxu0 0.0
        %834 = vmatpush1.msra.mxu0 0.0
        %835 = vmatprep.subr.mxu0 0.0
        %836 = vmatpush1.msra.mxu0 0.0
        %837 = vmatprep.subr.mxu0 0.0
        %838 = vmatpush1.msra.mxu0 0.0
        %839 = vmatprep.subr.mxu0 0.0
        %840 = vmatpush1.msra.mxu0 0.0
        %841 = vmatprep.subr.mxu0 0.0
        %842 = vmatpush1.msra.mxu0 0.0
        %843 = vmatprep.subr.mxu0 0.0
        %844 = vmatpush1.msra.mxu0 0.0
        %845 = vmatprep.subr.mxu0 0.0
        %846 = vmatpush1.msra.mxu0 0.0
        %847 = vmatprep.subr.mxu0 0.0
        %848 = vmatpush1.msra.mxu0 0.0
        %849 = vmatprep.subr.mxu0 0.0
        %850 = vmatpush1.msra.mxu0 0.0
        %851 = vmatprep.subr.mxu0 0.0
        %852 = vmatpush1.msra.mxu0 0.0
        %853 = vmatprep.subr.mxu0 0.0
        %854 = vmatpush1.msra.mxu0 0.0
        %855 = vmatprep.subr.mxu0 0.0
        %856 = vmatpush1.msra.mxu0 0.0
        %857 = vmatprep.subr.mxu0 0.0
        %858 = vmatpush1.msra.mxu0 0.0
        %859 = vmatprep.subr.mxu0 0.0
        %860 = vmatpush1.msra.mxu0 0.0
        %861 = vmatprep.subr.mxu0 0.0
        %862 = vmatpush1.msra.mxu0 0.0
        %863 = vmatprep.subr.mxu0 0.0
        %864 = vmatpush1.msra.mxu0 0.0
        %865 = vmatprep.subr.mxu0 0.0
        %866 = vmatpush1.msra.mxu0 0.0
        %867 = vmatprep.mubr.f32.mxu0 0.0
        %868 = vmatmul.mubr.f32.gmra.mrb[0].mxu0 %v730
        %v869 = vpop.f32.mrb[0].mxu0
        %v870 = vadd.f32 %v726, %v869
        %v871 = vpop.f32.mrb[0].mxu0
        %872 = vdwg.mxu0
        %873 = vst [vmem:[%s190] sm:$0xff] %v799
        %874 = vst [vmem:[%s190 + $0x8] sm:$0xff] %v801
        %vm875 = vcmask 261120
        %876 = vst.msk [vmem:[%s190 + $0x10] sm:$0xff] %vm875, %v870
        %s877 = sand.u32 %s115, 1
        %s878 = scalar_lea.sflag [#allocation4], %s877
        %s879 = sand.u32 %s115, 1
        %s880 = smul.addr %s879, 24
        %s881 = scalar_lea.vmem [#allocation3], %s880
        // Predicated region
        $region37: #{tpu_custom_call.1} parent=35 // pred_check
          %p882 = pneg %p125
        $region38: #{tpu_custom_call.1} parent=35 // pred_check_branch
          %884 = sbr.rel (%p882) target = $region40
        $region39: #{tpu_custom_call.1} parent=35 // pred_region
          %s886 = ssub.s32 384, 384
          %887 = vsyncadd %s878, %s886
          %s888 = smul.addr %s18, 3
          %s889 = smul.addr %s888, 128
          %s890 = scalar_lea.hbm %s4, %s889
          %s892 = sshll.u32 %s881, 4
          %s893 = int_to_ptr.vmem [resolvable:$true] %s892
          %895 = dma.vmem_to_hbm [thread:$0]  %s893, 384, %s890, %s878
        $region40: #{tpu_custom_call.1} parent=35 // pred_fallthru
          _
      $region36: #{tpu_custom_call.1} parent=5 // pred_fallthru
        _
      %p896 = scmp.le.s32.totalorder 2, %s13
      // Predicated region
      $region41: #{tpu_custom_call.1} parent=5 // pred_check
        %p897 = pneg %p896
      $region42: #{tpu_custom_call.1} parent=5 // pred_check_branch
        %899 = sbr.rel (%p897) target = $region44
      $region43: #{tpu_custom_call.1} parent=5 // pred_region
        %s900 = ssub.s32 %s13, 2
        // Predicated region
        $region45: #{tpu_custom_call.1} parent=43 // pred_check
          %p901 = pneg %p131
        $region46: #{tpu_custom_call.1} parent=43 // pred_check_branch
          %903 = sbr.rel (%p901) target = $region48
        $region47: #{tpu_custom_call.1} parent=43 // pred_region
          %s904 = sand.u32 %s116, 1
          %s905 = scalar_lea.sflag [#allocation4], %s904
          %s906 = sand.u32 %s116, 1
          %s907 = smul.addr %s906, 24
          %s908 = scalar_lea.vmem [#allocation3], %s907
          %909 = dma.done %s905, 384
        $region48: #{tpu_custom_call.1} parent=43 // pred_fallthru
          _
      $region44: #{tpu_custom_call.1} parent=5 // pred_fallthru
        _
    $region6: #{tpu_custom_call.1} parent=1 // loop_footer
      %s17 = sadd.s32 1, %s13
    $region7: #{tpu_custom_call.1} parent=1 // loop_footer_branch
      %12 = sbr.rel target = $region3
    $region8: #{tpu_custom_call.1} parent=1 // loop_exit
      _
    %910 = vsyncpa [#allocation4], 1
    %s911 = scalar_lea.sflag [#allocation4], 1
    %912 = vsyncpa %s911, 1

</llo_original>
